<compile_context>
chip_gen: v5e
topology: v5e:2x2
jax: 0.10.0
libtpu: 0.0.40
codegen_flags: <defaults>
</compile_context>

<pallas_src>
import jax
import jax.numpy as jnp
from jax.experimental import pallas as pl
from jax.experimental.pallas import tpu as pltpu


def _round_up(x, m):
    return ((x + m - 1) // m) * m


def _make_conv_silu_kernel(KH, KW, W_in, M_out):
    """Kernel factory closing over static conv geometry.

    Refs:
      w_ref: (KH*KW, Cout, Cin) bf16  -- per-tap weight slabs (replicated)
      b_ref: (Cout, 1)          f32   -- bias (replicated)
      x_ref: (1, Cin, L_in)     bf16  -- one batch row, flat spatial, padded
      o_ref: (1, Cout, M_out)         -- flat (H*W, lane-padded) output grid
    """
    def kernel(w_ref, b_ref, x_ref, o_ref):
        acc = None
        for kh in range(KH):
            for kw in range(KW):
                t = kh * KW + kw            # tap index into the weight slab
                d = kh * W_in + kw          # flat spatial offset of this tap
                xs = x_ref[0, :, d:d + M_out]                  # (Cin, M_out) bf16
                c = jnp.dot(w_ref[t], xs,                      # (Cout, M_out) f32
                            preferred_element_type=jnp.float32)
                acc = c if acc is None else acc + c
        acc = acc + b_ref[...]                                 # bias (lane broadcast)
        o_ref[0] = (acc * jax.nn.sigmoid(acc)).astype(o_ref.dtype)   # SiLU / swish
    return kernel


def nugget_forward(x_nchw, w_oihw, bias):
    """Matches Nugget.forward: NCHW in -> NCHW out (valid conv, stride 1, SiLU)."""
    N, Cin, H, W = x_nchw.shape
    Cout, Cin_w, KH, KW = w_oihw.shape
    assert Cin == Cin_w
    Hout, Wout = H - KH + 1, W - KW + 1
    HW = H * W
    d_max = (KH - 1) * W + (KW - 1)         # largest in-kernel tap offset

    # Lane-dense extents: output on the full (padded) H*W grid; input padded so
    # every tap's static slice [d, d + M_out) stays in bounds.
    M_out = _round_up(HW, 128)
    L_in = _round_up(M_out + d_max, 128)

    # ---- wrapper-side layout plumbing only (reshape/cast/pad, no 9x slab) ----
    x_flat = x_nchw.reshape(N, Cin, HW).astype(jnp.bfloat16)
    if L_in != HW:
        x_flat = jnp.pad(x_flat, ((0, 0), (0, 0), (0, L_in - HW)))
    # Per-tap weights: w_taps[kh*KW + kw, co, ci] = w[co, ci, kh, kw]
    w_taps = jnp.transpose(w_oihw, (2, 3, 0, 1)).reshape(KH * KW, Cout, Cin)
    w_taps = w_taps.astype(jnp.bfloat16)
    b2 = bias.reshape(Cout, 1).astype(jnp.float32)

    kernel = _make_conv_silu_kernel(KH, KW, W, M_out)

    out_bytes = N * Cout * M_out * jnp.dtype(x_nchw.dtype).itemsize
    cost = pl.CostEstimate(
        flops=2 * N * Cout * KH * KW * Cin * Hout * Wout,
        transcendentals=N * Cout * Hout * Wout,
        bytes_accessed=int(x_flat.size) * 2 + int(w_taps.size) * 2
                       + int(b2.size) * 4 + int(out_bytes),
    )

    out_padded = pl.pallas_call(
        kernel,
        out_shape=jax.ShapeDtypeStruct((N, Cout, M_out), x_nchw.dtype),
        grid=(N,),
        in_specs=[
            pl.BlockSpec((KH * KW, Cout, Cin), lambda n: (0, 0, 0)),  # weights
            pl.BlockSpec((Cout, 1), lambda n: (0, 0)),                # bias
            pl.BlockSpec((1, Cin, L_in), lambda n: (n, 0, 0)),        # activations
        ],
        out_specs=pl.BlockSpec((1, Cout, M_out), lambda n: (n, 0, 0)),
        compiler_params=pltpu.CompilerParams(
            dimension_semantics=("parallel",)),   # N>=2 keeps both v7x TCs busy
        cost_estimate=cost,
    )(w_taps, b2, x_flat)

    # Valid conv outputs live at flat index oh*W + ow; drop lane pad, the
    # invalid bottom/right rim, and reshape straight to NCHW (no transposes).
    out = out_padded[:, :, :HW].reshape(N, Cout, H, W)[:, :, :Hout, :Wout]
    return out


def _reference_forward(x_nchw, w_oihw, bias):
    """Pure-JAX f32 reference (mirrors nn.Conv2d + nn.SiLU)."""
    y = jax.lax.conv_general_dilated(
        x_nchw, w_oihw, window_strides=(1, 1), padding="VALID",
        dimension_numbers=("NCHW", "OIHW", "NCHW"),
    )
    y = y + bias.reshape(1, -1, 1, 1)
    return y * jax.nn.sigmoid(y)


if __name__ == "__main__":
    # Nugget(in_channels=4, out_channels=8, kernel_size=3) on a (2, 4, 16, 16) input.
    in_channels, out_channels, kernel_size = 4, 8, 3
    N, H, W = 2, 16, 16

    key = jax.random.PRNGKey(0)
    kx, kw, kb = jax.random.split(key, 3)

    x = jax.random.normal(kx, (N, in_channels, H, W), dtype=jnp.float32)

    # Deterministic parameter init (PyTorch-style uniform bound 1/sqrt(fan_in)).
    fan_in = in_channels * kernel_size * kernel_size
    bound = 1.0 / (fan_in ** 0.5)
    w = jax.random.uniform(
        kw, (out_channels, in_channels, kernel_size, kernel_size),
        minval=-bound, maxval=bound, dtype=jnp.float32)
    b = jax.random.uniform(
        kb, (out_channels,), minval=-bound, maxval=bound, dtype=jnp.float32)

    out = jax.block_until_ready(nugget_forward(x, w, b))
    ref = jax.block_until_ready(_reference_forward(x, w, b))

    assert out.shape == ref.shape == (N, out_channels, H - kernel_size + 1,
                                      W - kernel_size + 1)
    # bf16 matmul operands (f32 accumulation/epilogue) -> loosened tolerance.
    assert jnp.allclose(out, ref, atol=5e-2, rtol=5e-2), float(
        jnp.max(jnp.abs(out - ref)))

    print("KERNEL_OK")
</pallas_src>

<mosaic_0001>
module attributes {stable_mosaic.version = 11 : i64} {
  func.func @kernel(%arg0: i32, %arg1: memref<9x8x4xbf16, #tpu.memory_space<vmem>>, %arg2: memref<8x1xf32, #tpu.memory_space<vmem>>, %arg3: memref<1x4x384xbf16, #tpu.memory_space<vmem>>, %arg4: memref<1x8x256xf32, #tpu.memory_space<vmem>>) attributes {dimension_semantics = [#tpu.dimension_semantics<parallel>], iteration_bounds = array<i64: 2>, scalar_prefetch = 0 : i64, scratch_operands = 0 : i64, tpu.core_type = #tpu.core_type<tc>, window_params = [{pipeline_mode = #tpu.pipeline_mode<synchronous>, transform_indices = @transform_0, window_bounds = array<i64: 9, 8, 4>}, {pipeline_mode = #tpu.pipeline_mode<synchronous>, transform_indices = @transform_1, window_bounds = array<i64: 8, 1>}, {transform_indices = @transform_2, window_bounds = array<i64: 1, 4, 384>}, {transform_indices = @transform_3, window_bounds = array<i64: 1, 8, 256>}]} {
    %c0 = arith.constant 0 : index
    %c0_0 = arith.constant 0 : index
    %c0_1 = arith.constant 0 : index
    %0 = vector.load %arg3[%c0, %c0_0, %c0_1] : memref<1x4x384xbf16, #tpu.memory_space<vmem>>, vector<1x4x256xbf16>
    %1 = vector.shape_cast %0 : vector<1x4x256xbf16> to vector<4x256xbf16>
    %c0_2 = arith.constant 0 : index
    %c0_3 = arith.constant 0 : index
    %c0_4 = arith.constant 0 : index
    %2 = vector.load %arg1[%c0_2, %c0_3, %c0_4] : memref<9x8x4xbf16, #tpu.memory_space<vmem>>, vector<1x8x4xbf16>
    %3 = vector.shape_cast %2 : vector<1x8x4xbf16> to vector<8x4xbf16>
    %cst = arith.constant dense<0.000000e+00> : vector<8x256xf32>
    %4 = tpu.matmul %3, %1, %cst {dimension_numbers = #tpu.dot_dimension_numbers<[1], [0], [0], [1], [0, 0, 1, 1], [], []>} : vector<8x4xbf16>, vector<4x256xbf16>, vector<8x256xf32> -> vector<8x256xf32>
    %c0_5 = arith.constant 0 : index
    %c0_6 = arith.constant 0 : index
    %c1 = arith.constant 1 : index
    %5 = vector.load %arg3[%c0_5, %c0_6, %c1] : memref<1x4x384xbf16, #tpu.memory_space<vmem>>, vector<1x4x256xbf16>
    %6 = vector.shape_cast %5 : vector<1x4x256xbf16> to vector<4x256xbf16>
    %c1_7 = arith.constant 1 : index
    %c0_8 = arith.constant 0 : index
    %c0_9 = arith.constant 0 : index
    %7 = vector.load %arg1[%c1_7, %c0_8, %c0_9] : memref<9x8x4xbf16, #tpu.memory_space<vmem>>, vector<1x8x4xbf16>
    %8 = vector.shape_cast %7 : vector<1x8x4xbf16> to vector<8x4xbf16>
    %cst_10 = arith.constant dense<0.000000e+00> : vector<8x256xf32>
    %9 = tpu.matmul %8, %6, %cst_10 {dimension_numbers = #tpu.dot_dimension_numbers<[1], [0], [0], [1], [0, 0, 1, 1], [], []>} : vector<8x4xbf16>, vector<4x256xbf16>, vector<8x256xf32> -> vector<8x256xf32>
    %10 = arith.addf %4, %9 : vector<8x256xf32>
    %c0_11 = arith.constant 0 : index
    %c0_12 = arith.constant 0 : index
    %c2 = arith.constant 2 : index
    %11 = vector.load %arg3[%c0_11, %c0_12, %c2] : memref<1x4x384xbf16, #tpu.memory_space<vmem>>, vector<1x4x256xbf16>
    %12 = vector.shape_cast %11 : vector<1x4x256xbf16> to vector<4x256xbf16>
    %c2_13 = arith.constant 2 : index
    %c0_14 = arith.constant 0 : index
    %c0_15 = arith.constant 0 : index
    %13 = vector.load %arg1[%c2_13, %c0_14, %c0_15] : memref<9x8x4xbf16, #tpu.memory_space<vmem>>, vector<1x8x4xbf16>
    %14 = vector.shape_cast %13 : vector<1x8x4xbf16> to vector<8x4xbf16>
    %cst_16 = arith.constant dense<0.000000e+00> : vector<8x256xf32>
    %15 = tpu.matmul %14, %12, %cst_16 {dimension_numbers = #tpu.dot_dimension_numbers<[1], [0], [0], [1], [0, 0, 1, 1], [], []>} : vector<8x4xbf16>, vector<4x256xbf16>, vector<8x256xf32> -> vector<8x256xf32>
    %16 = arith.addf %10, %15 : vector<8x256xf32>
    %c0_17 = arith.constant 0 : index
    %c0_18 = arith.constant 0 : index
    %c16 = arith.constant 16 : index
    %17 = vector.load %arg3[%c0_17, %c0_18, %c16] : memref<1x4x384xbf16, #tpu.memory_space<vmem>>, vector<1x4x256xbf16>
    %18 = vector.shape_cast %17 : vector<1x4x256xbf16> to vector<4x256xbf16>
    %c3 = arith.constant 3 : index
    %c0_19 = arith.constant 0 : index
    %c0_20 = arith.constant 0 : index
    %19 = vector.load %arg1[%c3, %c0_19, %c0_20] : memref<9x8x4xbf16, #tpu.memory_space<vmem>>, vector<1x8x4xbf16>
    %20 = vector.shape_cast %19 : vector<1x8x4xbf16> to vector<8x4xbf16>
    %cst_21 = arith.constant dense<0.000000e+00> : vector<8x256xf32>
    %21 = tpu.matmul %20, %18, %cst_21 {dimension_numbers = #tpu.dot_dimension_numbers<[1], [0], [0], [1], [0, 0, 1, 1], [], []>} : vector<8x4xbf16>, vector<4x256xbf16>, vector<8x256xf32> -> vector<8x256xf32>
    %22 = arith.addf %16, %21 : vector<8x256xf32>
    %c0_22 = arith.constant 0 : index
    %c0_23 = arith.constant 0 : index
    %c17 = arith.constant 17 : index
    %23 = vector.load %arg3[%c0_22, %c0_23, %c17] : memref<1x4x384xbf16, #tpu.memory_space<vmem>>, vector<1x4x256xbf16>
    %24 = vector.shape_cast %23 : vector<1x4x256xbf16> to vector<4x256xbf16>
    %c4 = arith.constant 4 : index
    %c0_24 = arith.constant 0 : index
    %c0_25 = arith.constant 0 : index
    %25 = vector.load %arg1[%c4, %c0_24, %c0_25] : memref<9x8x4xbf16, #tpu.memory_space<vmem>>, vector<1x8x4xbf16>
    %26 = vector.shape_cast %25 : vector<1x8x4xbf16> to vector<8x4xbf16>
    %cst_26 = arith.constant dense<0.000000e+00> : vector<8x256xf32>
    %27 = tpu.matmul %26, %24, %cst_26 {dimension_numbers = #tpu.dot_dimension_numbers<[1], [0], [0], [1], [0, 0, 1, 1], [], []>} : vector<8x4xbf16>, vector<4x256xbf16>, vector<8x256xf32> -> vector<8x256xf32>
    %28 = arith.addf %22, %27 : vector<8x256xf32>
    %c0_27 = arith.constant 0 : index
    %c0_28 = arith.constant 0 : index
    %c18 = arith.constant 18 : index
    %29 = vector.load %arg3[%c0_27, %c0_28, %c18] : memref<1x4x384xbf16, #tpu.memory_space<vmem>>, vector<1x4x256xbf16>
    %30 = vector.shape_cast %29 : vector<1x4x256xbf16> to vector<4x256xbf16>
    %c5 = arith.constant 5 : index
    %c0_29 = arith.constant 0 : index
    %c0_30 = arith.constant 0 : index
    %31 = vector.load %arg1[%c5, %c0_29, %c0_30] : memref<9x8x4xbf16, #tpu.memory_space<vmem>>, vector<1x8x4xbf16>
    %32 = vector.shape_cast %31 : vector<1x8x4xbf16> to vector<8x4xbf16>
    %cst_31 = arith.constant dense<0.000000e+00> : vector<8x256xf32>
    %33 = tpu.matmul %32, %30, %cst_31 {dimension_numbers = #tpu.dot_dimension_numbers<[1], [0], [0], [1], [0, 0, 1, 1], [], []>} : vector<8x4xbf16>, vector<4x256xbf16>, vector<8x256xf32> -> vector<8x256xf32>
    %34 = arith.addf %28, %33 : vector<8x256xf32>
    %c0_32 = arith.constant 0 : index
    %c0_33 = arith.constant 0 : index
    %c32 = arith.constant 32 : index
    %35 = vector.load %arg3[%c0_32, %c0_33, %c32] : memref<1x4x384xbf16, #tpu.memory_space<vmem>>, vector<1x4x256xbf16>
    %36 = vector.shape_cast %35 : vector<1x4x256xbf16> to vector<4x256xbf16>
    %c6 = arith.constant 6 : index
    %c0_34 = arith.constant 0 : index
    %c0_35 = arith.constant 0 : index
    %37 = vector.load %arg1[%c6, %c0_34, %c0_35] : memref<9x8x4xbf16, #tpu.memory_space<vmem>>, vector<1x8x4xbf16>
    %38 = vector.shape_cast %37 : vector<1x8x4xbf16> to vector<8x4xbf16>
    %cst_36 = arith.constant dense<0.000000e+00> : vector<8x256xf32>
    %39 = tpu.matmul %38, %36, %cst_36 {dimension_numbers = #tpu.dot_dimension_numbers<[1], [0], [0], [1], [0, 0, 1, 1], [], []>} : vector<8x4xbf16>, vector<4x256xbf16>, vector<8x256xf32> -> vector<8x256xf32>
    %40 = arith.addf %34, %39 : vector<8x256xf32>
    %c0_37 = arith.constant 0 : index
    %c0_38 = arith.constant 0 : index
    %c33 = arith.constant 33 : index
    %41 = vector.load %arg3[%c0_37, %c0_38, %c33] : memref<1x4x384xbf16, #tpu.memory_space<vmem>>, vector<1x4x256xbf16>
    %42 = vector.shape_cast %41 : vector<1x4x256xbf16> to vector<4x256xbf16>
    %c7 = arith.constant 7 : index
    %c0_39 = arith.constant 0 : index
    %c0_40 = arith.constant 0 : index
    %43 = vector.load %arg1[%c7, %c0_39, %c0_40] : memref<9x8x4xbf16, #tpu.memory_space<vmem>>, vector<1x8x4xbf16>
    %44 = vector.shape_cast %43 : vector<1x8x4xbf16> to vector<8x4xbf16>
    %cst_41 = arith.constant dense<0.000000e+00> : vector<8x256xf32>
    %45 = tpu.matmul %44, %42, %cst_41 {dimension_numbers = #tpu.dot_dimension_numbers<[1], [0], [0], [1], [0, 0, 1, 1], [], []>} : vector<8x4xbf16>, vector<4x256xbf16>, vector<8x256xf32> -> vector<8x256xf32>
    %46 = arith.addf %40, %45 : vector<8x256xf32>
    %c0_42 = arith.constant 0 : index
    %c0_43 = arith.constant 0 : index
    %c34 = arith.constant 34 : index
    %47 = vector.load %arg3[%c0_42, %c0_43, %c34] : memref<1x4x384xbf16, #tpu.memory_space<vmem>>, vector<1x4x256xbf16>
    %48 = vector.shape_cast %47 : vector<1x4x256xbf16> to vector<4x256xbf16>
    %c8 = arith.constant 8 : index
    %c0_44 = arith.constant 0 : index
    %c0_45 = arith.constant 0 : index
    %49 = vector.load %arg1[%c8, %c0_44, %c0_45] : memref<9x8x4xbf16, #tpu.memory_space<vmem>>, vector<1x8x4xbf16>
    %50 = vector.shape_cast %49 : vector<1x8x4xbf16> to vector<8x4xbf16>
    %cst_46 = arith.constant dense<0.000000e+00> : vector<8x256xf32>
    %51 = tpu.matmul %50, %48, %cst_46 {dimension_numbers = #tpu.dot_dimension_numbers<[1], [0], [0], [1], [0, 0, 1, 1], [], []>} : vector<8x4xbf16>, vector<4x256xbf16>, vector<8x256xf32> -> vector<8x256xf32>
    %52 = arith.addf %46, %51 : vector<8x256xf32>
    %c0_47 = arith.constant 0 : index
    %c0_48 = arith.constant 0 : index
    %53 = vector.load %arg2[%c0_47, %c0_48] : memref<8x1xf32, #tpu.memory_space<vmem>>, vector<8x1xf32>
    %54 = vector.broadcast %53 : vector<8x1xf32> to vector<8x256xf32>
    %55 = arith.addf %52, %54 : vector<8x256xf32>
    %56 = arith.negf %55 : vector<8x256xf32>
    %57 = math.exp %56 : vector<8x256xf32>
    %cst_49 = arith.constant 1.000000e+00 : f32
    %58 = vector.broadcast %cst_49 : f32 to vector<8x256xf32>
    %59 = arith.addf %58, %57 : vector<8x256xf32>
    %60 = arith.divf %58, %59 : vector<8x256xf32>
    %61 = arith.mulf %55, %60 : vector<8x256xf32>
    %c0_50 = arith.constant 0 : index
    %c0_51 = arith.constant 0 : index
    %c0_52 = arith.constant 0 : index
    %62 = vector.load %arg4[%c0_50, %c0_51, %c0_52] : memref<1x8x256xf32, #tpu.memory_space<vmem>>, vector<1x8x256xf32>
    %63 = vector.shape_cast %62 : vector<1x8x256xf32> to vector<8x256xf32>
    %64 = vector.shape_cast %61 : vector<8x256xf32> to vector<1x8x256xf32>
    tpu.vector_store %arg4[%c0_50, %c0_51, %c0_52], %64 {strides = array<i32>} : memref<1x8x256xf32, #tpu.memory_space<vmem>>, vector<1x8x256xf32>,
    return
  }
  func.func @transform_0(%arg0: i32) -> (i32, i32, i32) {
    %c0_i32 = arith.constant 0 : i32
    %c0_i32_0 = arith.constant 0 : i32
    %c0_i32_1 = arith.constant 0 : i32
    %c0_i32_2 = arith.constant 0 : i32
    return %c0_i32, %c0_i32_0, %c0_i32_1 : i32, i32, i32
  }
  func.func @transform_1(%arg0: i32) -> (i32, i32) {
    %c0_i32 = arith.constant 0 : i32
    %c0_i32_0 = arith.constant 0 : i32
    %c0_i32_1 = arith.constant 0 : i32
    return %c0_i32, %c0_i32_0 : i32, i32
  }
  func.func @transform_2(%arg0: i32) -> (i32, i32, i32) {
    %c0_i32 = arith.constant 0 : i32
    %c0_i32_0 = arith.constant 0 : i32
    %c0_i32_1 = arith.constant 0 : i32
    return %arg0, %c0_i32, %c0_i32_0 : i32, i32, i32
  }
  func.func @transform_3(%arg0: i32) -> (i32, i32, i32) {
    %c0_i32 = arith.constant 0 : i32
    %c0_i32_0 = arith.constant 0 : i32
    %c0_i32_1 = arith.constant 0 : i32
    return %arg0, %c0_i32, %c0_i32_0 : i32, i32, i32
  }
}

</mosaic_0001>

<llo_original>
// kernel: tpu_custom_call.1
$region0: #{tpu_custom_call.1}
  #allocation0 [shape = 'u32[]', space=smem, size = 0x4, offset = 0x4, fixed_abs, tag = 'smem constant byte address 0x4 - core index']
  #allocation1 [shape = 'u32[72,128]{1,0:T(1,128)}', space=vmem, size = 0x9000, scoped, tag = 'internal scratch']
  %s0 = inlined_call_operand.vmem [shape: bf16[9,8,4], index: 0, kind: input, shape index: {}]
  %s1 = inlined_call_operand.vmem [shape: f32[8,1], index: 1, kind: input, shape index: {}]
  %s2 = inlined_call_operand.vmem [shape: bf16[2,4,384], index: 2, kind: input, shape index: {}]
  %s3 = inlined_call_operand.hbm [shape: f32[2,8,256], index: 3, kind: output, shape index: {}]
  %s4 = sld [smem:[#allocation0]]
  $region45: #{tpu_custom_call.1} parent=0
    _
  %s6 = ssub.s32 1, %s4
  %s7 = scalar_select 0, %s6, %s4
  $region1: #{tpu_custom_call.1} parent=0
    #allocation2 [shape = 'u8[16384]{0}', space=vmem, size = 0x4000, scoped, tag = 'output window, operand 0']
    #allocation3 [shape = 's32[2]{0}', space=sflag, size = 0x8, scoped, tag = 'scoped memory for tpu_custom_call.1']
    %8 = vsyncpa [#allocation3], 0
    %s9 = scalar_lea.sflag [#allocation3], 1
    %10 = vsyncpa %s9, 0
    loop: start=0, step=1, limit=4
    $region2: #{tpu_custom_call.1} parent=1 // loop_pre_header
      _
    $region3: #{tpu_custom_call.1} parent=1 // loop_header
      %s12 = sphi 0, %s16
      %p13 = scmp.ge.s32.totalorder %s12, 4
      %s20 = sphi 0, %s20
      %s22 = sphi 0, %s20
      %s23 = sphi 0, %s22
      %s37 = sphi 0, %s23
      %s41 = sphi 0, %s41
      %s43 = sphi 0, %s41
      %s44 = sphi 0, %s43
      %s58 = sphi 0, %s44
      %s64 = sphi 0, %s66
      %s67 = sphi 0, %s64
      %s68 = sphi 0, %s67
      %s84 = sphi 0, %s68
      %s90 = sphi 0, %s92
      %s93 = sphi 0, %s90
      %s94 = sphi 0, %s93
      %s110 = sphi 0, %s94
    $region4: #{tpu_custom_call.1} parent=1 // loop_header_branch
      %15 = sbr.rel (%p13) target = $region8
    $region5: #{tpu_custom_call.1} parent=1 // loop_body
      %s17 = ssub.s32 %s12, 1
      %s18 = ssub.s32 %s12, 2
      %s19 = sadd.s32 %s12, 1
      %s21 = sadd.s32 %s20, 1
      %p24 = scmp.eq.s32.totalorder %s12, 1
      %p25 = scmp.ne.s32.totalorder %s20, %s22
      %p26 = scmp.eq.s32.totalorder %s12, 0
      %p27 = por %p25, %p26
      %p28 = scmp.ne.s32.totalorder %s20, %s22
      %p29 = scmp.eq.s32.totalorder %s17, 1
      %p30 = por %p28, %p29
      %p31 = scmp.ne.s32.totalorder %s22, %s23
      %p32 = scmp.eq.s32.totalorder %s17, 0
      %p33 = por %p31, %p32
      %p34 = scmp.ne.s32.totalorder %s22, %s23
      %p35 = scmp.eq.s32.totalorder %s18, 1
      %p36 = por %p34, %p35
      %p38 = scmp.ne.s32.totalorder %s23, %s37
      %p39 = scmp.eq.s32.totalorder %s18, 0
      %p40 = por %p38, %p39
      %s42 = sadd.s32 %s41, 1
      %p45 = scmp.eq.s32.totalorder %s12, 1
      %p46 = scmp.ne.s32.totalorder %s41, %s43
      %p47 = scmp.eq.s32.totalorder %s12, 0
      %p48 = por %p46, %p47
      %p49 = scmp.ne.s32.totalorder %s41, %s43
      %p50 = scmp.eq.s32.totalorder %s17, 1
      %p51 = por %p49, %p50
      %p52 = scmp.ne.s32.totalorder %s43, %s44
      %p53 = scmp.eq.s32.totalorder %s17, 0
      %p54 = por %p52, %p53
      %p55 = scmp.ne.s32.totalorder %s43, %s44
      %p56 = scmp.eq.s32.totalorder %s18, 1
      %p57 = por %p55, %p56
      %p59 = scmp.ne.s32.totalorder %s44, %s58
      %p60 = scmp.eq.s32.totalorder %s18, 0
      %p61 = por %p59, %p60
      %s62 = ssub.s32 %s12, %s19
      %p63 = scmp.eq.s32.totalorder %s62, 0
      %s65 = sadd.s32 %s64, 1
      %s66 = scalar_select %p63, %s64, %s65
      %p69 = pneg %p63
      %p70 = scmp.eq.s32.totalorder %s12, 1
      %p71 = por %p69, %p70
      %p72 = scmp.ne.s32.totalorder %s64, %s67
      %p73 = scmp.eq.s32.totalorder %s12, 0
      %p74 = por %p72, %p73
      %p75 = scmp.ne.s32.totalorder %s64, %s67
      %p76 = scmp.eq.s32.totalorder %s17, 1
      %p77 = por %p75, %p76
      %p78 = scmp.ne.s32.totalorder %s67, %s68
      %p79 = scmp.eq.s32.totalorder %s17, 0
      %p80 = por %p78, %p79
      %p81 = scmp.ne.s32.totalorder %s67, %s68
      %p82 = scmp.eq.s32.totalorder %s18, 1
      %p83 = por %p81, %p82
      %p85 = scmp.ne.s32.totalorder %s68, %s84
      %p86 = scmp.eq.s32.totalorder %s18, 0
      %p87 = por %p85, %p86
      %s88 = ssub.s32 %s12, %s19
      %p89 = scmp.eq.s32.totalorder %s88, 0
      %s91 = sadd.s32 %s90, 1
      %s92 = scalar_select %p89, %s90, %s91
      %p95 = pneg %p89
      %p96 = scmp.eq.s32.totalorder %s12, 1
      %p97 = por %p95, %p96
      %p98 = scmp.ne.s32.totalorder %s90, %s93
      %p99 = scmp.eq.s32.totalorder %s12, 0
      %p100 = por %p98, %p99
      %p101 = scmp.ne.s32.totalorder %s90, %s93
      %p102 = scmp.eq.s32.totalorder %s17, 1
      %p103 = por %p101, %p102
      %p104 = scmp.ne.s32.totalorder %s93, %s94
      %p105 = scmp.eq.s32.totalorder %s17, 0
      %p106 = por %p104, %p105
      %p107 = scmp.ne.s32.totalorder %s93, %s94
      %p108 = scmp.eq.s32.totalorder %s18, 1
      %p109 = por %p107, %p108
      %p111 = scmp.ne.s32.totalorder %s94, %s110
      %p112 = scmp.eq.s32.totalorder %s18, 0
      %p113 = por %p111, %p112
      %p114 = scmp.le.s32.totalorder 1, %s12
      %p115 = scmp.lt.s32.totalorder %s12, 3
      %p116 = pnand %p114, %p115
      %p117 = pneg %p116
      // Predicated region
      $region9: #{tpu_custom_call.1} parent=5 // pred_check
        _
      $region10: #{tpu_custom_call.1} parent=5 // pred_check_branch
        %119 = sbr.rel (%p116) target = $region12
      $region11: #{tpu_custom_call.1} parent=5 // pred_region
        %s120 = ssub.s32 %s12, 1
        // Predicated region
        $region13: #{tpu_custom_call.1} parent=11 // pred_check
          %p121 = pneg %p33
        $region14: #{tpu_custom_call.1} parent=11 // pred_check_branch
          %123 = sbr.rel (%p121) target = $region16
        $region15: #{tpu_custom_call.1} parent=11 // pred_region
          _
        $region16: #{tpu_custom_call.1} parent=11 // pred_fallthru
          _
        // Predicated region
        $region17: #{tpu_custom_call.1} parent=11 // pred_check
          %p124 = pneg %p54
        $region18: #{tpu_custom_call.1} parent=11 // pred_check_branch
          %126 = sbr.rel (%p124) target = $region20
        $region19: #{tpu_custom_call.1} parent=11 // pred_region
          _
        $region20: #{tpu_custom_call.1} parent=11 // pred_fallthru
          _
      $region12: #{tpu_custom_call.1} parent=5 // pred_fallthru
        _
      %p127 = scmp.lt.s32.totalorder %s12, 2
      // Predicated region
      $region21: #{tpu_custom_call.1} parent=5 // pred_check
        %p128 = pneg %p127
      $region22: #{tpu_custom_call.1} parent=5 // pred_check_branch
        %130 = sbr.rel (%p128) target = $region24
      $region23: #{tpu_custom_call.1} parent=5 // pred_region
        // Predicated region
        $region25: #{tpu_custom_call.1} parent=23 // pred_check
          %p131 = pneg %p74
        $region26: #{tpu_custom_call.1} parent=23 // pred_check_branch
          %133 = sbr.rel (%p131) target = $region28
        $region27: #{tpu_custom_call.1} parent=23 // pred_region
          %p134 = scmp.lt.s32.totalorder %s12, 1
          %s135 = scalar_select %p134, %s12, 1
          %s136 = smul.addr %s135, 3
          %s137 = smul.addr %s136, 2
          %s138 = scalar_lea.vmem %s2, %s137
        $region28: #{tpu_custom_call.1} parent=23 // pred_fallthru
          _
      $region24: #{tpu_custom_call.1} parent=5 // pred_fallthru
        _
      %p139 = scmp.le.s32.totalorder 1, %s12
      %p140 = scmp.lt.s32.totalorder %s12, 3
      %p141 = pnand %p139, %p140
      %p142 = pneg %p141
      // Predicated region
      $region29: #{tpu_custom_call.1} parent=5 // pred_check
        _
      $region30: #{tpu_custom_call.1} parent=5 // pred_check_branch
        %144 = sbr.rel (%p141) target = $region32
      $region31: #{tpu_custom_call.1} parent=5 // pred_region
        %s145 = ssub.s32 %s12, 1
        %p146 = pneg %p33
        %p147 = pneg %p30
        %p148 = pneg %p54
        %p149 = pneg %p51
        %p150 = scmp.lt.s32.totalorder %s17, 1
        %s151 = scalar_select %p150, %s17, 1
        %s152 = smul.addr %s151, 3
        %s153 = smul.addr %s152, 2
        %s154 = scalar_lea.vmem %s2, %s153
        %p155 = pneg %p80
        %p156 = pneg %p77
        %p157 = pneg %p106
        %p158 = pneg %p103
        %s159 = sand.u32 %s93, 1
        %s160 = scalar_lea.sflag [#allocation3], %s159
        %s161 = sand.u32 %s93, 1
        %s162 = smul.addr %s161, 16
        %s163 = scalar_lea.vmem [#allocation2], %s162
        %p164 = scmp.lt.s32.totalorder %s17, 1
        %s165 = scalar_select %p164, %s17, 1
        %s166 = smul.addr %s165, 3
        %s167 = smul.addr %s166, 2
        %s168 = scalar_lea.vmem %s2, %s167
        %v170 = vld [vmem:[%s168] sm:$0xf]
        %v171 = vld [vmem:[%s0] sm:$0xf]
        %v172 = vld [vmem:[%s168] sm:$0x3f]
        %s173 = scalar_lea.vmem %s0, 4
        %v174 = vld [vmem:[%s173] sm:$0xf]
        %176 = vst [vmem:[#allocation1] ss:$4 sm:$0xff] %v172
        %v177 = vld.sshfl [vmem:[#allocation1] sm:$0xff pattern:$0x73625140]
        %v179 = vld.sshfl [vmem:[#allocation1 + $0x8] sm:$0xff pattern:$0x73625140]
        %v181 = vld.sshfl [vmem:[#allocation1 + $0x10] sm:$0xff pattern:$0x73625140]
        %183 = vrot.lane.b32.xlu0 %v177, 127
        %v184 = vpop.permute.xlu0 %183
        %185 = vrot.lane.b32.xlu0 %v179, 127
        %v186 = vpop.permute.xlu0 %185
        %187 = vrot.lane.b32.xlu0 %v181, 127
        %v188 = vpop.permute.xlu0 %187
        %vm189 = vcmask 1039360
        %v190 = vsel %vm189, %v184, %v186
        %v191 = vsel %vm189, %v186, %v188
        %vm192 = vcmask 31744
        %v194 = vsel %vm192, %v174, 0
        %vm196 = vcmask 1041408
        %v198 = vsel %vm196, %v190, 0
        %v201 = vsel %vm196, %v191, 0
        %203 = vmatpush.bf16.msra.mxu0 0
        %204 = vmatpush.bf16.msra.mxu0 0
        %205 = vmatpush.bf16.msra.mxu0 0
        %206 = vmatpush.bf16.msra.mxu0 0
        %207 = vmatpush.bf16.msra.mxu0 0
        %208 = vmatpush.bf16.msra.mxu0 0
        %209 = vmatpush.bf16.msra.mxu0 0
        %210 = vmatpush.bf16.msra.mxu0 %v198
        %211 = vmatmul.bf16.gmra.mxu0 %v194
        %v212 = vpop.f32.mrf.mxu0
        %v213 = vadd.f32 0.0, %v212
        %v214 = vpop.f32.mrf.mxu0
        %215 = vdwg.mxu0
        %216 = vmatpush.bf16.msra.mxu0 0
        %217 = vmatpush.bf16.msra.mxu0 0
        %218 = vmatpush.bf16.msra.mxu0 0
        %219 = vmatpush.bf16.msra.mxu0 0
        %220 = vmatpush.bf16.msra.mxu0 0
        %221 = vmatpush.bf16.msra.mxu0 0
        %222 = vmatpush.bf16.msra.mxu0 0
        %223 = vmatpush.bf16.msra.mxu0 %v201
        %224 = vmatmul.bf16.gmra.mxu0 %v194
        %v225 = vpop.f32.mrf.mxu0
        %v226 = vadd.f32 0.0, %v225
        %v227 = vpop.f32.mrf.mxu0
        %228 = vdwg.mxu0
        %230 = vst [vmem:[#allocation1] ss:$4 sm:$0xff] %v170
        %v231 = vld.sshfl [vmem:[#allocation1] sm:$0xff pattern:$0x73625140]
        %v232 = vld.sshfl [vmem:[#allocation1 + $0x8] sm:$0xff pattern:$0x73625140]
        %v234 = vsel %vm192, %v171, 0
        %v236 = vsel %vm196, %v231, 0
        %v238 = vsel %vm196, %v232, 0
        %240 = vmatpush.bf16.msra.mxu0 0
        %241 = vmatpush.bf16.msra.mxu0 0
        %242 = vmatpush.bf16.msra.mxu0 0
        %243 = vmatpush.bf16.msra.mxu0 0
        %244 = vmatpush.bf16.msra.mxu0 0
        %245 = vmatpush.bf16.msra.mxu0 0
        %246 = vmatpush.bf16.msra.mxu0 0
        %247 = vmatpush.bf16.msra.mxu0 %v236
        %248 = vmatmul.bf16.gmra.mxu0 %v234
        %v249 = vpop.f32.mrf.mxu0
        %v250 = vadd.f32 %v213, %v249
        %v251 = vpop.f32.mrf.mxu0
        %252 = vdwg.mxu0
        %253 = vmatpush.bf16.msra.mxu0 0
        %254 = vmatpush.bf16.msra.mxu0 0
        %255 = vmatpush.bf16.msra.mxu0 0
        %256 = vmatpush.bf16.msra.mxu0 0
        %257 = vmatpush.bf16.msra.mxu0 0
        %258 = vmatpush.bf16.msra.mxu0 0
        %259 = vmatpush.bf16.msra.mxu0 0
        %260 = vmatpush.bf16.msra.mxu0 %v238
        %261 = vmatmul.bf16.gmra.mxu0 %v234
        %v262 = vpop.f32.mrf.mxu0
        %v263 = vadd.f32 %v226, %v262
        %v264 = vpop.f32.mrf.mxu0
        %265 = vdwg.mxu0
        %v266 = vld [vmem:[%s168] sm:$0x3f]
        %s267 = scalar_lea.vmem %s0, 8
        %v268 = vld [vmem:[%s267] sm:$0xf]
        %270 = vst [vmem:[#allocation1] ss:$4 sm:$0xff] %v266
        %v271 = vld.sshfl [vmem:[#allocation1] sm:$0xff pattern:$0x73625140]
        %v273 = vld.sshfl [vmem:[#allocation1 + $0x8] sm:$0xff pattern:$0x73625140]
        %v275 = vld.sshfl [vmem:[#allocation1 + $0x10] sm:$0xff pattern:$0x73625140]
        %277 = vrot.lane.b32.xlu0 %v271, 126
        %v278 = vpop.permute.xlu0 %277
        %279 = vrot.lane.b32.xlu0 %v273, 126
        %v280 = vpop.permute.xlu0 %279
        %281 = vrot.lane.b32.xlu0 %v275, 126
        %v282 = vpop.permute.xlu0 %281
        %vm283 = vcmask 1031168
        %v284 = vsel %vm283, %v278, %v280
        %v285 = vsel %vm283, %v280, %v282
        %v287 = vsel %vm192, %v268, 0
        %v290 = vsel %vm196, %v284, 0
        %v293 = vsel %vm196, %v285, 0
        %295 = vmatpush.bf16.msra.mxu0 0
        %296 = vmatpush.bf16.msra.mxu0 0
        %297 = vmatpush.bf16.msra.mxu0 0
        %298 = vmatpush.bf16.msra.mxu0 0
        %299 = vmatpush.bf16.msra.mxu0 0
        %300 = vmatpush.bf16.msra.mxu0 0
        %301 = vmatpush.bf16.msra.mxu0 0
        %302 = vmatpush.bf16.msra.mxu0 %v290
        %303 = vmatmul.bf16.gmra.mxu0 %v287
        %v304 = vpop.f32.mrf.mxu0
        %v305 = vadd.f32 0.0, %v304
        %v306 = vpop.f32.mrf.mxu0
        %307 = vdwg.mxu0
        %308 = vmatpush.bf16.msra.mxu0 0
        %309 = vmatpush.bf16.msra.mxu0 0
        %310 = vmatpush.bf16.msra.mxu0 0
        %311 = vmatpush.bf16.msra.mxu0 0
        %312 = vmatpush.bf16.msra.mxu0 0
        %313 = vmatpush.bf16.msra.mxu0 0
        %314 = vmatpush.bf16.msra.mxu0 0
        %315 = vmatpush.bf16.msra.mxu0 %v293
        %316 = vmatmul.bf16.gmra.mxu0 %v287
        %v317 = vpop.f32.mrf.mxu0
        %v318 = vadd.f32 0.0, %v317
        %v319 = vpop.f32.mrf.mxu0
        %320 = vdwg.mxu0
        %v321 = vadd.f32 %v250, %v305
        %v322 = vadd.f32 %v263, %v318
        %v323 = vld [vmem:[%s168] sm:$0x3f]
        %s324 = scalar_lea.vmem %s0, 12
        %v325 = vld [vmem:[%s324] sm:$0xf]
        %327 = vst [vmem:[#allocation1] ss:$4 sm:$0xff] %v323
        %v328 = vld.sshfl [vmem:[#allocation1] sm:$0xff pattern:$0x73625140]
        %v330 = vld.sshfl [vmem:[#allocation1 + $0x8] sm:$0xff pattern:$0x73625140]
        %v332 = vld.sshfl [vmem:[#allocation1 + $0x10] sm:$0xff pattern:$0x73625140]
        %334 = vrot.lane.b32.xlu0 %v328, 112
        %v335 = vpop.permute.xlu0 %334
        %336 = vrot.lane.b32.xlu0 %v330, 112
        %v337 = vpop.permute.xlu0 %336
        %338 = vrot.lane.b32.xlu0 %v332, 112
        %v339 = vpop.permute.xlu0 %338
        %vm340 = vcmask 916480
        %v341 = vsel %vm340, %v335, %v337
        %v342 = vsel %vm340, %v337, %v339
        %v344 = vsel %vm192, %v325, 0
        %v347 = vsel %vm196, %v341, 0
        %v350 = vsel %vm196, %v342, 0
        %352 = vmatpush.bf16.msra.mxu0 0
        %353 = vmatpush.bf16.msra.mxu0 0
        %354 = vmatpush.bf16.msra.mxu0 0
        %355 = vmatpush.bf16.msra.mxu0 0
        %356 = vmatpush.bf16.msra.mxu0 0
        %357 = vmatpush.bf16.msra.mxu0 0
        %358 = vmatpush.bf16.msra.mxu0 0
        %359 = vmatpush.bf16.msra.mxu0 %v347
        %360 = vmatmul.bf16.gmra.mxu0 %v344
        %v361 = vpop.f32.mrf.mxu0
        %v362 = vadd.f32 0.0, %v361
        %v363 = vpop.f32.mrf.mxu0
        %364 = vdwg.mxu0
        %365 = vmatpush.bf16.msra.mxu0 0
        %366 = vmatpush.bf16.msra.mxu0 0
        %367 = vmatpush.bf16.msra.mxu0 0
        %368 = vmatpush.bf16.msra.mxu0 0
        %369 = vmatpush.bf16.msra.mxu0 0
        %370 = vmatpush.bf16.msra.mxu0 0
        %371 = vmatpush.bf16.msra.mxu0 0
        %372 = vmatpush.bf16.msra.mxu0 %v350
        %373 = vmatmul.bf16.gmra.mxu0 %v344
        %v374 = vpop.f32.mrf.mxu0
        %v375 = vadd.f32 0.0, %v374
        %v376 = vpop.f32.mrf.mxu0
        %377 = vdwg.mxu0
        %v378 = vadd.f32 %v321, %v362
        %v379 = vadd.f32 %v322, %v375
        %v380 = vld [vmem:[%s168] sm:$0x3f]
        %s381 = scalar_lea.vmem %s0, 16
        %v382 = vld [vmem:[%s381] sm:$0xf]
        %384 = vst [vmem:[#allocation1] ss:$4 sm:$0xff] %v380
        %v385 = vld.sshfl [vmem:[#allocation1] sm:$0xff pattern:$0x73625140]
        %v387 = vld.sshfl [vmem:[#allocation1 + $0x8] sm:$0xff pattern:$0x73625140]
        %v389 = vld.sshfl [vmem:[#allocation1 + $0x10] sm:$0xff pattern:$0x73625140]
        %391 = vrot.lane.b32.xlu0 %v385, 111
        %v392 = vpop.permute.xlu0 %391
        %393 = vrot.lane.b32.xlu0 %v387, 111
        %v394 = vpop.permute.xlu0 %393
        %395 = vrot.lane.b32.xlu0 %v389, 111
        %v396 = vpop.permute.xlu0 %395
        %vm397 = vcmask 908288
        %v398 = vsel %vm397, %v392, %v394
        %v399 = vsel %vm397, %v394, %v396
        %v401 = vsel %vm192, %v382, 0
        %v404 = vsel %vm196, %v398, 0
        %v407 = vsel %vm196, %v399, 0
        %409 = vmatpush.bf16.msra.mxu0 0
        %410 = vmatpush.bf16.msra.mxu0 0
        %411 = vmatpush.bf16.msra.mxu0 0
        %412 = vmatpush.bf16.msra.mxu0 0
        %413 = vmatpush.bf16.msra.mxu0 0
        %414 = vmatpush.bf16.msra.mxu0 0
        %415 = vmatpush.bf16.msra.mxu0 0
        %416 = vmatpush.bf16.msra.mxu0 %v404
        %417 = vmatmul.bf16.gmra.mxu0 %v401
        %v418 = vpop.f32.mrf.mxu0
        %v419 = vadd.f32 0.0, %v418
        %v420 = vpop.f32.mrf.mxu0
        %421 = vdwg.mxu0
        %422 = vmatpush.bf16.msra.mxu0 0
        %423 = vmatpush.bf16.msra.mxu0 0
        %424 = vmatpush.bf16.msra.mxu0 0
        %425 = vmatpush.bf16.msra.mxu0 0
        %426 = vmatpush.bf16.msra.mxu0 0
        %427 = vmatpush.bf16.msra.mxu0 0
        %428 = vmatpush.bf16.msra.mxu0 0
        %429 = vmatpush.bf16.msra.mxu0 %v407
        %430 = vmatmul.bf16.gmra.mxu0 %v401
        %v431 = vpop.f32.mrf.mxu0
        %v432 = vadd.f32 0.0, %v431
        %v433 = vpop.f32.mrf.mxu0
        %434 = vdwg.mxu0
        %v435 = vadd.f32 %v378, %v419
        %v436 = vadd.f32 %v379, %v432
        %v437 = vld [vmem:[%s168] sm:$0x3f]
        %s438 = scalar_lea.vmem %s0, 20
        %v439 = vld [vmem:[%s438] sm:$0xf]
        %441 = vst [vmem:[#allocation1] ss:$4 sm:$0xff] %v437
        %v442 = vld.sshfl [vmem:[#allocation1] sm:$0xff pattern:$0x73625140]
        %v444 = vld.sshfl [vmem:[#allocation1 + $0x8] sm:$0xff pattern:$0x73625140]
        %v446 = vld.sshfl [vmem:[#allocation1 + $0x10] sm:$0xff pattern:$0x73625140]
        %448 = vrot.lane.b32.xlu0 %v442, 110
        %v449 = vpop.permute.xlu0 %448
        %450 = vrot.lane.b32.xlu0 %v444, 110
        %v451 = vpop.permute.xlu0 %450
        %452 = vrot.lane.b32.xlu0 %v446, 110
        %v453 = vpop.permute.xlu0 %452
        %vm454 = vcmask 900096
        %v455 = vsel %vm454, %v449, %v451
        %v456 = vsel %vm454, %v451, %v453
        %v458 = vsel %vm192, %v439, 0
        %v461 = vsel %vm196, %v455, 0
        %v464 = vsel %vm196, %v456, 0
        %466 = vmatpush.bf16.msra.mxu0 0
        %467 = vmatpush.bf16.msra.mxu0 0
        %468 = vmatpush.bf16.msra.mxu0 0
        %469 = vmatpush.bf16.msra.mxu0 0
        %470 = vmatpush.bf16.msra.mxu0 0
        %471 = vmatpush.bf16.msra.mxu0 0
        %472 = vmatpush.bf16.msra.mxu0 0
        %473 = vmatpush.bf16.msra.mxu0 %v461
        %474 = vmatmul.bf16.gmra.mxu0 %v458
        %v475 = vpop.f32.mrf.mxu0
        %v476 = vadd.f32 0.0, %v475
        %v477 = vpop.f32.mrf.mxu0
        %478 = vdwg.mxu0
        %479 = vmatpush.bf16.msra.mxu0 0
        %480 = vmatpush.bf16.msra.mxu0 0
        %481 = vmatpush.bf16.msra.mxu0 0
        %482 = vmatpush.bf16.msra.mxu0 0
        %483 = vmatpush.bf16.msra.mxu0 0
        %484 = vmatpush.bf16.msra.mxu0 0
        %485 = vmatpush.bf16.msra.mxu0 0
        %486 = vmatpush.bf16.msra.mxu0 %v464
        %487 = vmatmul.bf16.gmra.mxu0 %v458
        %v488 = vpop.f32.mrf.mxu0
        %v489 = vadd.f32 0.0, %v488
        %v490 = vpop.f32.mrf.mxu0
        %491 = vdwg.mxu0
        %v492 = vadd.f32 %v435, %v476
        %v493 = vadd.f32 %v436, %v489
        %v494 = vld [vmem:[%s168] sm:$0x3f]
        %s495 = scalar_lea.vmem %s0, 24
        %v496 = vld [vmem:[%s495] sm:$0xf]
        %498 = vst [vmem:[#allocation1] ss:$4 sm:$0xff] %v494
        %v499 = vld.sshfl [vmem:[#allocation1] sm:$0xff pattern:$0x73625140]
        %v501 = vld.sshfl [vmem:[#allocation1 + $0x8] sm:$0xff pattern:$0x73625140]
        %v503 = vld.sshfl [vmem:[#allocation1 + $0x10] sm:$0xff pattern:$0x73625140]
        %505 = vrot.lane.b32.xlu0 %v499, 96
        %v506 = vpop.permute.xlu0 %505
        %507 = vrot.lane.b32.xlu0 %v501, 96
        %v508 = vpop.permute.xlu0 %507
        %509 = vrot.lane.b32.xlu0 %v503, 96
        %v510 = vpop.permute.xlu0 %509
        %vm511 = vcmask 785408
        %v512 = vsel %vm511, %v506, %v508
        %v513 = vsel %vm511, %v508, %v510
        %v515 = vsel %vm192, %v496, 0
        %v518 = vsel %vm196, %v512, 0
        %v521 = vsel %vm196, %v513, 0
        %523 = vmatpush.bf16.msra.mxu0 0
        %524 = vmatpush.bf16.msra.mxu0 0
        %525 = vmatpush.bf16.msra.mxu0 0
        %526 = vmatpush.bf16.msra.mxu0 0
        %527 = vmatpush.bf16.msra.mxu0 0
        %528 = vmatpush.bf16.msra.mxu0 0
        %529 = vmatpush.bf16.msra.mxu0 0
        %530 = vmatpush.bf16.msra.mxu0 %v518
        %531 = vmatmul.bf16.gmra.mxu0 %v515
        %v532 = vpop.f32.mrf.mxu0
        %v533 = vadd.f32 0.0, %v532
        %v534 = vpop.f32.mrf.mxu0
        %535 = vdwg.mxu0
        %536 = vmatpush.bf16.msra.mxu0 0
        %537 = vmatpush.bf16.msra.mxu0 0
        %538 = vmatpush.bf16.msra.mxu0 0
        %539 = vmatpush.bf16.msra.mxu0 0
        %540 = vmatpush.bf16.msra.mxu0 0
        %541 = vmatpush.bf16.msra.mxu0 0
        %542 = vmatpush.bf16.msra.mxu0 0
        %543 = vmatpush.bf16.msra.mxu0 %v521
        %544 = vmatmul.bf16.gmra.mxu0 %v515
        %v545 = vpop.f32.mrf.mxu0
        %v546 = vadd.f32 0.0, %v545
        %v547 = vpop.f32.mrf.mxu0
        %548 = vdwg.mxu0
        %v549 = vadd.f32 %v492, %v533
        %v550 = vadd.f32 %v493, %v546
        %v551 = vld [vmem:[%s168] sm:$0x3f]
        %s552 = scalar_lea.vmem %s0, 28
        %v553 = vld [vmem:[%s552] sm:$0xf]
        %555 = vst [vmem:[#allocation1] ss:$4 sm:$0xff] %v551
        %v556 = vld.sshfl [vmem:[#allocation1] sm:$0xff pattern:$0x73625140]
        %v558 = vld.sshfl [vmem:[#allocation1 + $0x8] sm:$0xff pattern:$0x73625140]
        %v560 = vld.sshfl [vmem:[#allocation1 + $0x10] sm:$0xff pattern:$0x73625140]
        %562 = vrot.lane.b32.xlu0 %v556, 95
        %v563 = vpop.permute.xlu0 %562
        %564 = vrot.lane.b32.xlu0 %v558, 95
        %v565 = vpop.permute.xlu0 %564
        %566 = vrot.lane.b32.xlu0 %v560, 95
        %v567 = vpop.permute.xlu0 %566
        %vm568 = vcmask 777216
        %v569 = vsel %vm568, %v563, %v565
        %v570 = vsel %vm568, %v565, %v567
        %v572 = vsel %vm192, %v553, 0
        %v575 = vsel %vm196, %v569, 0
        %v578 = vsel %vm196, %v570, 0
        %580 = vmatpush.bf16.msra.mxu0 0
        %581 = vmatpush.bf16.msra.mxu0 0
        %582 = vmatpush.bf16.msra.mxu0 0
        %583 = vmatpush.bf16.msra.mxu0 0
        %584 = vmatpush.bf16.msra.mxu0 0
        %585 = vmatpush.bf16.msra.mxu0 0
        %586 = vmatpush.bf16.msra.mxu0 0
        %587 = vmatpush.bf16.msra.mxu0 %v575
        %588 = vmatmul.bf16.gmra.mxu0 %v572
        %v589 = vpop.f32.mrf.mxu0
        %v590 = vadd.f32 0.0, %v589
        %v591 = vpop.f32.mrf.mxu0
        %592 = vdwg.mxu0
        %593 = vmatpush.bf16.msra.mxu0 0
        %594 = vmatpush.bf16.msra.mxu0 0
        %595 = vmatpush.bf16.msra.mxu0 0
        %596 = vmatpush.bf16.msra.mxu0 0
        %597 = vmatpush.bf16.msra.mxu0 0
        %598 = vmatpush.bf16.msra.mxu0 0
        %599 = vmatpush.bf16.msra.mxu0 0
        %600 = vmatpush.bf16.msra.mxu0 %v578
        %601 = vmatmul.bf16.gmra.mxu0 %v572
        %v602 = vpop.f32.mrf.mxu0
        %v603 = vadd.f32 0.0, %v602
        %v604 = vpop.f32.mrf.mxu0
        %605 = vdwg.mxu0
        %v606 = vadd.f32 %v549, %v590
        %v607 = vadd.f32 %v550, %v603
        %v608 = vld [vmem:[%s168] sm:$0x3f]
        %s609 = scalar_lea.vmem %s0, 32
        %v610 = vld [vmem:[%s609] sm:$0xf]
        %612 = vst [vmem:[#allocation1] ss:$4 sm:$0xff] %v608
        %v613 = vld.sshfl [vmem:[#allocation1] sm:$0xff pattern:$0x73625140]
        %v615 = vld.sshfl [vmem:[#allocation1 + $0x8] sm:$0xff pattern:$0x73625140]
        %v617 = vld.sshfl [vmem:[#allocation1 + $0x10] sm:$0xff pattern:$0x73625140]
        %619 = vrot.lane.b32.xlu0 %v613, 94
        %v620 = vpop.permute.xlu0 %619
        %621 = vrot.lane.b32.xlu0 %v615, 94
        %v622 = vpop.permute.xlu0 %621
        %623 = vrot.lane.b32.xlu0 %v617, 94
        %v624 = vpop.permute.xlu0 %623
        %vm625 = vcmask 769024
        %v626 = vsel %vm625, %v620, %v622
        %v627 = vsel %vm625, %v622, %v624
        %v629 = vsel %vm192, %v610, 0
        %v632 = vsel %vm196, %v626, 0
        %v635 = vsel %vm196, %v627, 0
        %637 = vmatpush.bf16.msra.mxu0 0
        %638 = vmatpush.bf16.msra.mxu0 0
        %639 = vmatpush.bf16.msra.mxu0 0
        %640 = vmatpush.bf16.msra.mxu0 0
        %641 = vmatpush.bf16.msra.mxu0 0
        %642 = vmatpush.bf16.msra.mxu0 0
        %643 = vmatpush.bf16.msra.mxu0 0
        %644 = vmatpush.bf16.msra.mxu0 %v632
        %645 = vmatmul.bf16.gmra.mxu0 %v629
        %v646 = vpop.f32.mrf.mxu0
        %v647 = vadd.f32 0.0, %v646
        %v648 = vpop.f32.mrf.mxu0
        %649 = vdwg.mxu0
        %650 = vmatpush.bf16.msra.mxu0 0
        %651 = vmatpush.bf16.msra.mxu0 0
        %652 = vmatpush.bf16.msra.mxu0 0
        %653 = vmatpush.bf16.msra.mxu0 0
        %654 = vmatpush.bf16.msra.mxu0 0
        %655 = vmatpush.bf16.msra.mxu0 0
        %656 = vmatpush.bf16.msra.mxu0 0
        %657 = vmatpush.bf16.msra.mxu0 %v635
        %658 = vmatmul.bf16.gmra.mxu0 %v629
        %v659 = vpop.f32.mrf.mxu0
        %v660 = vadd.f32 0.0, %v659
        %v661 = vpop.f32.mrf.mxu0
        %662 = vdwg.mxu0
        %v663 = vadd.f32 %v606, %v647
        %v664 = vadd.f32 %v607, %v660
        %v665 = vld [vmem:[%s1] sm:$0xff]
        %667 = vset.pattern.permute.xlu0 0
        %668 = vperm.xlu0 %667, %v665
        %v669 = vpop.permute.xlu0 %668
        %v671 = vadd.f32 %v663, %v669
        %v672 = vadd.f32 %v664, %v669
        %v673 = vxor.u32 %v671, 2147483648
        %v674 = vxor.u32 %v672, 2147483648
        %v675 = vmul.f32 %v673, 1.442695
        %v676 = vpow.pop %v675
        %v677 = vmul.f32 %v674, 1.442695
        %v678 = vpow.pop %v677
        %v679 = vadd.f32 %v676, 1.0
        %v680 = vadd.f32 %v678, 1.0
        %v681 = vrcp.pop %v679
        %v682 = vmul.f32 %v679, %v681
        %v683 = vsub.f32 1.0, %v682
        %v684 = vmul.f32 %v681, %v683
        %v685 = vadd.f32 %v681, %v684
        %vm686 = vweird.f32 %v679
        %vm687 = vweird.f32 %v681
        %vm688 = vmor %vm686, %vm687
        %v689 = vsel %vm688, %v681, %v685
        %v690 = vand.u32 2147483647, %v679
        %vm691 = vcmp.eq.f32.partialorder %v690, 8.507059e+37
        %v692 = vand.u32 %v679, 2147483648
        %v693 = vor.u32 1.1754944e-38, %v692
        %v694 = vsel %vm691, %v693, %v689
        %v695 = vmul.f32 1.0, %v694
        %v696 = vrcp.pop %v680
        %v697 = vmul.f32 %v680, %v696
        %v698 = vsub.f32 1.0, %v697
        %v699 = vmul.f32 %v696, %v698
        %v700 = vadd.f32 %v696, %v699
        %vm701 = vweird.f32 %v680
        %vm702 = vweird.f32 %v696
        %vm703 = vmor %vm701, %vm702
        %v704 = vsel %vm703, %v696, %v700
        %v705 = vand.u32 2147483647, %v680
        %vm706 = vcmp.eq.f32.partialorder %v705, 8.507059e+37
        %v707 = vand.u32 %v680, 2147483648
        %v708 = vor.u32 1.1754944e-38, %v707
        %v709 = vsel %vm706, %v708, %v704
        %v710 = vmul.f32 1.0, %v709
        %v711 = vmul.f32 %v671, %v695
        %v712 = vmul.f32 %v672, %v710
        %713 = vst [vmem:[%s163] sm:$0xff] %v711
        %714 = vst [vmem:[%s163 + $0x8] sm:$0xff] %v712
        %s715 = sand.u32 %s93, 1
        %s716 = scalar_lea.sflag [#allocation3], %s715
        %s717 = sand.u32 %s93, 1
        %s718 = smul.addr %s717, 16
        %s719 = scalar_lea.vmem [#allocation2], %s718
        // Predicated region
        $region33: #{tpu_custom_call.1} parent=31 // pred_check
          %p720 = pneg %p103
        $region34: #{tpu_custom_call.1} parent=31 // pred_check_branch
          %722 = sbr.rel (%p720) target = $region36
        $region35: #{tpu_custom_call.1} parent=31 // pred_region
          %724 = vsyncadd %s716, 0
          %s725 = smul.addr %s17, 2
          %s726 = smul.addr %s725, 8
          %s727 = scalar_lea.hbm %s3, %s726
          %s729 = sshll.u32 %s719, 4
          %s730 = int_to_ptr.vmem [resolvable:$true] %s729
          %s731 = sshll.u32 %s727, 4
          %s732 = int_to_ptr.hbm [resolvable:$true] %s731
          %734 = dma.vmem_to_hbm [thread:$0]  %s730, 256, %s732, %s716
        $region36: #{tpu_custom_call.1} parent=31 // pred_fallthru
          _
      $region32: #{tpu_custom_call.1} parent=5 // pred_fallthru
        _
      %p735 = scmp.le.s32.totalorder 2, %s12
      // Predicated region
      $region37: #{tpu_custom_call.1} parent=5 // pred_check
        %p736 = pneg %p735
      $region38: #{tpu_custom_call.1} parent=5 // pred_check_branch
        %738 = sbr.rel (%p736) target = $region40
      $region39: #{tpu_custom_call.1} parent=5 // pred_region
        %s739 = ssub.s32 %s12, 2
        // Predicated region
        $region41: #{tpu_custom_call.1} parent=39 // pred_check
          %p740 = pneg %p109
        $region42: #{tpu_custom_call.1} parent=39 // pred_check_branch
          %742 = sbr.rel (%p740) target = $region44
        $region43: #{tpu_custom_call.1} parent=39 // pred_region
          %s743 = sand.u32 %s94, 1
          %s744 = scalar_lea.sflag [#allocation3], %s743
          %s745 = sand.u32 %s94, 1
          %s746 = smul.addr %s745, 16
          %s747 = scalar_lea.vmem [#allocation2], %s746
          %749 = dma.done %s744, 256
        $region44: #{tpu_custom_call.1} parent=39 // pred_fallthru
          _
      $region40: #{tpu_custom_call.1} parent=5 // pred_fallthru
        _
    $region6: #{tpu_custom_call.1} parent=1 // loop_footer
      %s16 = sadd.s32 1, %s12
    $region7: #{tpu_custom_call.1} parent=1 // loop_footer_branch
      %11 = sbr.rel target = $region3
    $region8: #{tpu_custom_call.1} parent=1 // loop_exit
      _
    %750 = vsyncpa [#allocation3], 1
    %s751 = scalar_lea.sflag [#allocation3], 1
    %752 = vsyncpa %s751, 1

</llo_original>
